<compile_context>
chip_gen: v5e
topology: v5e:2x2
jax: 0.10.0
libtpu: 0.0.40
codegen_flags: <defaults>
</compile_context>

<pallas_src>
import jax
import jax.numpy as jnp
from jax.experimental import pallas as pl
from jax.experimental.pallas import tpu as pltpu

_LANE = 128
_SUBLANE = 8


def _round_up(v, m):
    return -(-v // m) * m


def _vmem_budget_bytes():
    """Per-generation VMEM budget with headroom (v7x: 64 MiB, v5e/v6e: 128 MiB)."""
    try:
        phys = int(pltpu.get_tpu_info().vmem_capacity_bytes)
    except Exception:
        phys = 64 << 20  # assume the smallest (v7x-class) if the query fails
    if phys <= (64 << 20):
        return 48 << 20
    return 100 << 20


def _pick_tb(B, H, Npad, itemsize, vmem_budget):
    """Largest batch tile (multiple of 8) whose pipelined footprint fits VMEM."""
    w_bytes = 2 * H * Npad * itemsize       # assume 2 weight buffers (fallback-safe)
    b_bytes = 2 * _SUBLANE * _LANE * 4      # padded bias tile
    avail = vmem_budget - w_bytes - b_bytes
    per_row = 2 * (H * itemsize + Npad * 4)  # double-buffered x tile + f32 out tile
    tb = (avail // per_row) // _SUBLANE * _SUBLANE if avail > 0 else 0
    if tb <= 0:
        tb = _SUBLANE                       # weight alone near budget; see TODO above
    tb = min(tb, 2048)                      # per-step (~0.35us) overhead amortized by here
    tb = min(tb, _round_up(B, _SUBLANE))    # never exceed the (sublane-padded) batch
    return max(tb, _SUBLANE)


def _classifier_kernel(x_ref, w_ref, b_ref, o_ref):
    # x: [tb, H]; w: [H, Npad] K-major; b: [1, Npad] f32; o: [tb, Npad] f32.
    logits = jnp.dot(x_ref[...], w_ref[...],
                     preferred_element_type=jnp.float32)          # MXU, f32 acc
    logits = logits + b_ref[...]                                   # -inf in padded lanes
    m = jnp.max(logits, axis=-1, keepdims=True)                    # XLU row reduce
    shifted = logits - m                                           # VPU
    lse = jnp.log(jnp.sum(jnp.exp(shifted), axis=-1, keepdims=True))  # EUP + XLU
    o_ref[...] = (shifted - lse).astype(o_ref.dtype)


def classifier_forward(x, weight, bias, *, tb=None, compute_dtype=None,
                       use_pallas=None):
    """x: [B, n_hid]; weight: [n_out, n_hid] (PyTorch layout); bias: [n_out]."""
    B, H = x.shape
    N, H2 = weight.shape
    assert H == H2, "weight must be [n_out, n_hid]"

    if use_pallas is None:
        # Launch-overhead gate: tiny problems are better fused into the XLA graph.
        use_pallas = 4 * (B * H + N * H + N + B * N) >= (64 << 10)
    if not use_pallas:
        return jnp.squeeze(jax.nn.log_softmax(x @ weight.T + bias, axis=-1))

    cd = jnp.float32 if compute_dtype is None else jnp.dtype(compute_dtype)
    itemsize = jnp.dtype(cd).itemsize

    # Lane-dense padding of the class axis: zero weight columns, -inf bias.
    Npad = _round_up(N, _LANE)
    x_c = x.astype(cd)
    if Npad == N:
        w_pad = weight.T.astype(cd)                       # [H, N], K-major
        b_pad = bias.reshape(1, N).astype(jnp.float32)
    else:
        w_pad = jnp.zeros((H, Npad), cd).at[:, :N].set(weight.T.astype(cd))
        b_pad = jnp.full((1, Npad), float("-inf"), jnp.float32)
        b_pad = b_pad.at[0, :N].set(bias.astype(jnp.float32))

    vmem_budget = _vmem_budget_bytes()
    if tb is None:
        tb = _pick_tb(B, H, Npad, itemsize, vmem_budget)
    else:
        tb = max(_SUBLANE, _round_up(min(tb, _round_up(B, _SUBLANE)), _SUBLANE))

    cost = pl.CostEstimate(
        flops=2 * B * H * Npad + 5 * B * Npad,
        transcendentals=B * Npad + B,
        bytes_accessed=itemsize * (B * H + H * Npad) + 4 * (Npad + B * Npad),
    )

    def _call(single_buffer_resident):
        if single_buffer_resident:
            # Grid-invariant operands: single-buffer to halve their VMEM footprint.
            w_spec = pl.BlockSpec((H, Npad), lambda i: (0, 0),
                                  pipeline_mode=pl.Buffered(1))
            b_spec = pl.BlockSpec((1, Npad), lambda i: (0, 0),
                                  pipeline_mode=pl.Buffered(1))
        else:
            w_spec = pl.BlockSpec((H, Npad), lambda i: (0, 0))
            b_spec = pl.BlockSpec((1, Npad), lambda i: (0, 0))
        return pl.pallas_call(
            _classifier_kernel,
            out_shape=jax.ShapeDtypeStruct((B, Npad), jnp.float32),
            grid=(pl.cdiv(B, tb),),
            in_specs=[
                pl.BlockSpec((tb, H), lambda i: (i, 0)),   # x: tiled over batch
                w_spec,                                    # weight: resident, K-major
                b_spec,                                    # bias: resident
            ],
            out_specs=pl.BlockSpec((tb, Npad), lambda i: (i, 0)),
            compiler_params=pltpu.CompilerParams(
                dimension_semantics=("parallel",),
                vmem_limit_bytes=int(vmem_budget),
            ),
            cost_estimate=cost,
        )(x_c, w_pad, b_pad)

    try:
        out_pad = _call(True)
    except Exception:
        # Fallback for jax versions that reject pipeline_mode=pl.Buffered(1).
        out_pad = _call(False)

    out = out_pad[:, :N] if Npad != N else out_pad
    return jnp.squeeze(out)   # mirrors torch .squeeze(); see TODO for n_out==1


if __name__ == "__main__":
    # Shapes consistent with the module: batch=8, n_hid=32, n_out=16.
    B, n_hid, n_out = 8, 32, 16

    key = jax.random.PRNGKey(0)
    kx, kw, kb, kx2 = jax.random.split(key, 4)
    bound = 1.0 / jnp.sqrt(jnp.float32(n_hid))
    x = jax.random.normal(kx, (B, n_hid), dtype=jnp.float32)
    weight = jax.random.uniform(kw, (n_out, n_hid), jnp.float32, -bound, bound)
    bias = jax.random.uniform(kb, (n_out,), jnp.float32, -bound, bound)

    # Force the Pallas path (default dispatch would pick fused jnp at this size).
    out = classifier_forward(x, weight, bias, use_pallas=True)
    out = jax.block_until_ready(out)

    ref = jax.nn.log_softmax(x @ weight.T + bias, axis=-1)
    assert out.shape == ref.shape, (out.shape, ref.shape)
    assert jnp.allclose(out, ref, atol=1e-5, rtol=1e-5), "mismatch vs reference"

    # Second check: batch not a multiple of the tile -> partial blocks and a
    # multi-step ("parallel") grid.
    B2 = 20
    x2 = jax.random.normal(kx2, (B2, n_hid), dtype=jnp.float32)
    out2 = classifier_forward(x2, weight, bias, tb=8, use_pallas=True)
    out2 = jax.block_until_ready(out2)
    ref2 = jax.nn.log_softmax(x2 @ weight.T + bias, axis=-1)
    assert out2.shape == ref2.shape, (out2.shape, ref2.shape)
    assert jnp.allclose(out2, ref2, atol=1e-5, rtol=1e-5), "mismatch (partial blocks)"

    print("KERNEL_OK")
</pallas_src>

<mosaic_0001>
module attributes {stable_mosaic.version = 11 : i64} {
  func.func @_classifier_kernel(%arg0: i32, %arg1: memref<8x32xf32, #tpu.memory_space<vmem>>, %arg2: memref<32x128xf32, #tpu.memory_space<vmem>>, %arg3: memref<1x128xf32, #tpu.memory_space<vmem>>, %arg4: memref<8x128xf32, #tpu.memory_space<vmem>>) attributes {dimension_semantics = [#tpu.dimension_semantics<parallel>], iteration_bounds = array<i64: 1>, scalar_prefetch = 0 : i64, scratch_operands = 0 : i64, tpu.core_type = #tpu.core_type<tc>, window_params = [{transform_indices = @transform_0, window_bounds = array<i64: 8, 32>}, {pipeline_mode = #tpu.pipeline_mode<synchronous>, transform_indices = @transform_1, window_bounds = array<i64: 32, 128>}, {pipeline_mode = #tpu.pipeline_mode<synchronous>, transform_indices = @transform_2, window_bounds = array<i64: 1, 128>}, {transform_indices = @transform_3, window_bounds = array<i64: 8, 128>}]} {
    %c0 = arith.constant 0 : index
    %c0_0 = arith.constant 0 : index
    %0 = vector.load %arg1[%c0, %c0_0] : memref<8x32xf32, #tpu.memory_space<vmem>>, vector<8x32xf32>
    %c0_1 = arith.constant 0 : index
    %c0_2 = arith.constant 0 : index
    %1 = vector.load %arg2[%c0_1, %c0_2] : memref<32x128xf32, #tpu.memory_space<vmem>>, vector<32x128xf32>
    %cst = arith.constant dense<0.000000e+00> : vector<8x128xf32>
    %2 = tpu.matmul %0, %1, %cst {dimension_numbers = #tpu.dot_dimension_numbers<[1], [0], [0], [1], [0, 0, 1, 1], [], []>} : vector<8x32xf32>, vector<32x128xf32>, vector<8x128xf32> -> vector<8x128xf32>
    %c0_3 = arith.constant 0 : index
    %c0_4 = arith.constant 0 : index
    %3 = vector.load %arg3[%c0_3, %c0_4] : memref<1x128xf32, #tpu.memory_space<vmem>>, vector<1x128xf32>
    %4 = vector.broadcast %3 : vector<1x128xf32> to vector<8x128xf32>
    %5 = arith.addf %2, %4 : vector<8x128xf32>
    %cst_5 = arith.constant dense<0xFF800000> : vector<8xf32>
    %6 = vector.multi_reduction <maximumf>, %5, %cst_5 [1] : vector<8x128xf32> to vector<8xf32>
    %7 = vector.shape_cast %6 : vector<8xf32> to vector<8x1xf32>
    %8 = vector.broadcast %7 : vector<8x1xf32> to vector<8x128xf32>
    %9 = arith.subf %5, %8 : vector<8x128xf32>
    %10 = math.exp %9 : vector<8x128xf32>
    %cst_6 = arith.constant dense<0.000000e+00> : vector<8xf32>
    %11 = vector.multi_reduction <add>, %10, %cst_6 [1] : vector<8x128xf32> to vector<8xf32>
    %12 = vector.shape_cast %11 : vector<8xf32> to vector<8x1xf32>
    %13 = math.log %12 : vector<8x1xf32>
    %14 = vector.broadcast %13 : vector<8x1xf32> to vector<8x128xf32>
    %15 = arith.subf %9, %14 : vector<8x128xf32>
    %c0_7 = arith.constant 0 : index
    %c0_8 = arith.constant 0 : index
    %16 = vector.load %arg4[%c0_7, %c0_8] : memref<8x128xf32, #tpu.memory_space<vmem>>, vector<8x128xf32>
    tpu.vector_store %arg4[%c0_7, %c0_8], %15 {strides = array<i32>} : memref<8x128xf32, #tpu.memory_space<vmem>>, vector<8x128xf32>,
    return
  }
  func.func @transform_0(%arg0: i32) -> (i32, i32) {
    %c0_i32 = arith.constant 0 : i32
    %c0_i32_0 = arith.constant 0 : i32
    return %arg0, %c0_i32 : i32, i32
  }
  func.func @transform_1(%arg0: i32) -> (i32, i32) {
    %c0_i32 = arith.constant 0 : i32
    %c0_i32_0 = arith.constant 0 : i32
    %c0_i32_1 = arith.constant 0 : i32
    return %c0_i32, %c0_i32_0 : i32, i32
  }
  func.func @transform_2(%arg0: i32) -> (i32, i32) {
    %c0_i32 = arith.constant 0 : i32
    %c0_i32_0 = arith.constant 0 : i32
    %c0_i32_1 = arith.constant 0 : i32
    return %c0_i32, %c0_i32_0 : i32, i32
  }
  func.func @transform_3(%arg0: i32) -> (i32, i32) {
    %c0_i32 = arith.constant 0 : i32
    %c0_i32_0 = arith.constant 0 : i32
    return %arg0, %c0_i32 : i32, i32
  }
}

module attributes {stable_mosaic.version = 11 : i64} {
  func.func @_classifier_kernel(%arg0: i32, %arg1: memref<8x32xf32, #tpu.memory_space<vmem>>, %arg2: memref<32x128xf32, #tpu.memory_space<vmem>>, %arg3: memref<1x128xf32, #tpu.memory_space<vmem>>, %arg4: memref<8x128xf32, #tpu.memory_space<vmem>>) attributes {dimension_semantics = [#tpu.dimension_semantics<parallel>], iteration_bounds = array<i64: 1>, scalar_prefetch = 0 : i64, scratch_operands = 0 : i64, tpu.core_type = #tpu.core_type<tc>, window_params = [{transform_indices = @transform_0, window_bounds = array<i64: 8, 32>}, {pipeline_mode = #tpu.pipeline_mode<synchronous>, transform_indices = @transform_1, window_bounds = array<i64: 32, 128>}, {pipeline_mode = #tpu.pipeline_mode<synchronous>, transform_indices = @transform_2, window_bounds = array<i64: 1, 128>}, {transform_indices = @transform_3, window_bounds = array<i64: 8, 128>}]} {
    %c0 = arith.constant 0 : index
    %c0_0 = arith.constant 0 : index
    %0 = vector.load %arg1[%c0, %c0_0] : memref<8x32xf32, #tpu.memory_space<vmem>>, vector<8x32xf32>
    %c0_1 = arith.constant 0 : index
    %c0_2 = arith.constant 0 : index
    %1 = vector.load %arg2[%c0_1, %c0_2] : memref<32x128xf32, #tpu.memory_space<vmem>>, vector<32x128xf32>
    %cst = arith.constant dense<0.000000e+00> : vector<8x128xf32>
    %2 = tpu.matmul %0, %1, %cst {dimension_numbers = #tpu.dot_dimension_numbers<[1], [0], [0], [1], [0, 0, 1, 1], [], []>} : vector<8x32xf32>, vector<32x128xf32>, vector<8x128xf32> -> vector<8x128xf32>
    %c0_3 = arith.constant 0 : index
    %c0_4 = arith.constant 0 : index
    %3 = vector.load %arg3[%c0_3, %c0_4] : memref<1x128xf32, #tpu.memory_space<vmem>>, vector<1x128xf32>
    %4 = vector.broadcast %3 : vector<1x128xf32> to vector<8x128xf32>
    %5 = arith.addf %2, %4 : vector<8x128xf32>
    %cst_5 = arith.constant dense<0xFF800000> : vector<8xf32>
    %6 = vector.multi_reduction <maximumf>, %5, %cst_5 [1] : vector<8x128xf32> to vector<8xf32>
    %7 = vector.shape_cast %6 : vector<8xf32> to vector<8x1xf32>
    %8 = vector.broadcast %7 : vector<8x1xf32> to vector<8x128xf32>
    %9 = arith.subf %5, %8 : vector<8x128xf32>
    %10 = math.exp %9 : vector<8x128xf32>
    %cst_6 = arith.constant dense<0.000000e+00> : vector<8xf32>
    %11 = vector.multi_reduction <add>, %10, %cst_6 [1] : vector<8x128xf32> to vector<8xf32>
    %12 = vector.shape_cast %11 : vector<8xf32> to vector<8x1xf32>
    %13 = math.log %12 : vector<8x1xf32>
    %14 = vector.broadcast %13 : vector<8x1xf32> to vector<8x128xf32>
    %15 = arith.subf %9, %14 : vector<8x128xf32>
    %c0_7 = arith.constant 0 : index
    %c0_8 = arith.constant 0 : index
    %16 = vector.load %arg4[%c0_7, %c0_8] : memref<8x128xf32, #tpu.memory_space<vmem>>, vector<8x128xf32>
    tpu.vector_store %arg4[%c0_7, %c0_8], %15 {strides = array<i32>} : memref<8x128xf32, #tpu.memory_space<vmem>>, vector<8x128xf32>,
    return
  }
  func.func @transform_0(%arg0: i32) -> (i32, i32) {
    %c0_i32 = arith.constant 0 : i32
    %c0_i32_0 = arith.constant 0 : i32
    return %arg0, %c0_i32 : i32, i32
  }
  func.func @transform_1(%arg0: i32) -> (i32, i32) {
    %c0_i32 = arith.constant 0 : i32
    %c0_i32_0 = arith.constant 0 : i32
    %c0_i32_1 = arith.constant 0 : i32
    return %c0_i32, %c0_i32_0 : i32, i32
  }
  func.func @transform_2(%arg0: i32) -> (i32, i32) {
    %c0_i32 = arith.constant 0 : i32
    %c0_i32_0 = arith.constant 0 : i32
    %c0_i32_1 = arith.constant 0 : i32
    return %c0_i32, %c0_i32_0 : i32, i32
  }
  func.func @transform_3(%arg0: i32) -> (i32, i32) {
    %c0_i32 = arith.constant 0 : i32
    %c0_i32_0 = arith.constant 0 : i32
    return %arg0, %c0_i32 : i32, i32
  }
}

</mosaic_0001>

<llo_original>
// kernel: tpu_custom_call.1
$region0: #{tpu_custom_call.1}
  #allocation0 [shape = 'u32[]', space=smem, size = 0x4, offset = 0x4, fixed_abs, tag = 'smem constant byte address 0x4 - core index']
  #allocation1 [shape = 'u32[72,128]{1,0:T(1,128)}', space=vmem, size = 0x9000, scoped, tag = 'internal scratch']
  %s0 = inlined_call_operand.hbm [shape: f32[8,32], index: 0, kind: input, shape index: {}]
  %s1 = inlined_call_operand.hbm [shape: f32[32,128], index: 1, kind: input, shape index: {}]
  %s2 = inlined_call_operand.vmem [shape: f32[1,128], index: 2, kind: input, shape index: {}]
  %s3 = inlined_call_operand.hbm [shape: f32[8,128], index: 3, kind: output, shape index: {}]
  %s4 = sld [smem:[#allocation0]]
  $region30: #{tpu_custom_call.1} parent=0
    _
  %s6 = ssub.s32 1, %s4
  %s7 = scalar_select 0, %s6, %s4
  $region1: #{tpu_custom_call.1} parent=0
    #allocation2 [shape = 'u8[4096]{0}', space=vmem, size = 0x1000, scoped, tag = 'input window, operand 0, single buffered']
    #allocation3 [shape = 's32[1]{0}', space=sflag, size = 0x4, scoped, tag = 'scoped memory for tpu_custom_call.1']
    #allocation4 [shape = 's32[1]{0}', space=sflag, size = 0x4, scoped, tag = 'scoped memory for tpu_custom_call.1']
    #allocation5 [shape = 'u8[16384]{0}', space=vmem, size = 0x4000, scoped, tag = 'input window, operand 1, single buffered']
    #allocation6 [shape = 's32[1]{0}', space=sflag, size = 0x4, scoped, tag = 'scoped memory for tpu_custom_call.1']
    #allocation7 [shape = 'u8[4096]{0}', space=vmem, size = 0x1000, scoped, tag = 'output window, operand 0, single buffered']
    %8 = vsyncpa [#allocation3], 0
    %9 = vsyncpa [#allocation6], 0
    %10 = vsyncpa [#allocation4], 0
    // Predicated region
    $region2: #{tpu_custom_call.1} parent=1 // pred_check
      _
    $region3: #{tpu_custom_call.1} parent=1 // pred_check_branch
      %12 = sbr.rel (0) target = $region5
    $region4: #{tpu_custom_call.1} parent=1 // pred_region
      %14 = vsyncadd [#allocation3], 0
      %s16 = sshll.u32 %s0, 4
      %s17 = int_to_ptr.hbm [resolvable:$true] %s16
      %s18 = sshll.u32 [#allocation2], 4
      %s19 = int_to_ptr.vmem [resolvable:$true] %s18
      %21 = dma.hbm_to_vmem [thread:$0]  %s17, 128, %s19, [#allocation3]
    $region5: #{tpu_custom_call.1} parent=1 // pred_fallthru
      _
    // Predicated region
    $region6: #{tpu_custom_call.1} parent=1 // pred_check
      _
    $region7: #{tpu_custom_call.1} parent=1 // pred_check_branch
      %23 = sbr.rel (0) target = $region9
    $region8: #{tpu_custom_call.1} parent=1 // pred_region
      %25 = vsyncadd [#allocation6], 0
      %s26 = sshll.u32 %s1, 4
      %s27 = int_to_ptr.hbm [resolvable:$true] %s26
      %s28 = sshll.u32 [#allocation5], 4
      %s29 = int_to_ptr.vmem [resolvable:$true] %s28
      %34 = dma.hbm_to_vmem [thread:$0]  %s27, 512, %s29, [#allocation6], 128, 128, 8
    $region9: #{tpu_custom_call.1} parent=1 // pred_fallthru
      _
    // Predicated region
    $region10: #{tpu_custom_call.1} parent=1 // pred_check
      _
    $region11: #{tpu_custom_call.1} parent=1 // pred_check_branch
      %36 = sbr.rel (0) target = $region13
    $region12: #{tpu_custom_call.1} parent=1 // pred_region
      _
    $region13: #{tpu_custom_call.1} parent=1 // pred_fallthru
      _
    // Predicated region
    $region14: #{tpu_custom_call.1} parent=1 // pred_check
      _
    $region15: #{tpu_custom_call.1} parent=1 // pred_check_branch
      %38 = sbr.rel (0) target = $region17
    $region16: #{tpu_custom_call.1} parent=1 // pred_region
      %40 = dma.done [#allocation3], 128
    $region17: #{tpu_custom_call.1} parent=1 // pred_fallthru
      _
    // Predicated region
    $region18: #{tpu_custom_call.1} parent=1 // pred_check
      _
    $region19: #{tpu_custom_call.1} parent=1 // pred_check_branch
      %42 = sbr.rel (0) target = $region21
    $region20: #{tpu_custom_call.1} parent=1 // pred_region
      %44 = dma.done [#allocation6], 512
    $region21: #{tpu_custom_call.1} parent=1 // pred_fallthru
      _
    %v45 = vld [vmem:[#allocation2] sm:$0xff]
    %v46 = vld [vmem:[#allocation5] sm:$0xff]
    %v47 = vld [vmem:[#allocation5 + $0x8] sm:$0xff]
    %v48 = vld [vmem:[#allocation5 + $0x10] sm:$0xff]
    %v49 = vld [vmem:[#allocation5 + $0x18] sm:$0xff]
    %v50 = vld [vmem:[%s2] sm:$0x1]
    %v52 = vperm.slane %v50, 0
    %vm54 = vcmask 261120
    %v56 = vsel %vm54, %v45, 0
    %58 = vmatpush.msra.mxu0 0.0
    %59 = vmatpush.msra.mxu0 0.0
    %60 = vmatpush.msra.mxu0 0.0
    %61 = vmatpush.msra.mxu0 0.0
    %62 = vmatpush.msra.mxu0 0.0
    %63 = vmatpush.msra.mxu0 0.0
    %64 = vmatpush.msra.mxu0 0.0
    %65 = vmatpush.msra.mxu0 0.0
    %66 = vmatpush.msra.mxu0 0.0
    %67 = vmatpush.msra.mxu0 0.0
    %68 = vmatpush.msra.mxu0 0.0
    %69 = vmatpush.msra.mxu0 0.0
    %70 = vmatpush.msra.mxu0 %v49
    %71 = vmatpush.msra.mxu0 %v48
    %72 = vmatpush.msra.mxu0 %v47
    %73 = vmatpush.msra.mxu0 %v46
    %74 = vmatmul.f32.gmra.mxu0 %v56
    %v75 = vpop.f32.mrf.mxu0
    %v76 = vadd.f32 %v52, %v75
    %77 = vdwg.mxu0
    %78 = vmax.xlane.f32.xlu0 %v76
    %v79 = vpop.xlane.xlu0 %78
    %v80 = vsub.f32 %v76, %v79
    %v81 = vmul.f32 %v80, 1.442695
    %v82 = vpow.pop %v81
    %83 = vadd.xlane.f32.xlu0 %v82
    %v84 = vpop.xlane.xlu0 %83
    %v85 = vlog2.pop %v84
    %v86 = vmul.f32 %v85, 0.6931472
    %v87 = vsub.f32 %v80, %v86
    %88 = vst [vmem:[#allocation7] sm:$0xff] %v87
    // Predicated region
    $region22: #{tpu_custom_call.1} parent=1 // pred_check
      _
    $region23: #{tpu_custom_call.1} parent=1 // pred_check_branch
      %90 = sbr.rel (0) target = $region25
    $region24: #{tpu_custom_call.1} parent=1 // pred_region
      %92 = vsyncadd [#allocation4], 0
      %s94 = sshll.u32 [#allocation7], 4
      %s95 = int_to_ptr.vmem [resolvable:$true] %s94
      %s96 = sshll.u32 %s3, 4
      %s97 = int_to_ptr.hbm [resolvable:$true] %s96
      %99 = dma.vmem_to_hbm [thread:$0]  %s95, 128, %s97, [#allocation4]
    $region25: #{tpu_custom_call.1} parent=1 // pred_fallthru
      _
    // Predicated region
    $region26: #{tpu_custom_call.1} parent=1 // pred_check
      _
    $region27: #{tpu_custom_call.1} parent=1 // pred_check_branch
      %101 = sbr.rel (0) target = $region29
    $region28: #{tpu_custom_call.1} parent=1 // pred_region
      %103 = dma.done [#allocation4], 128
    $region29: #{tpu_custom_call.1} parent=1 // pred_fallthru
      _
    %104 = vsyncpa [#allocation3], 1
    %105 = vsyncpa [#allocation6], 1
    %106 = vsyncpa [#allocation4], 1

// kernel: tpu_custom_call.1
$region0: #{tpu_custom_call.1}
  #allocation0 [shape = 'u32[]', space=smem, size = 0x4, offset = 0x4, fixed_abs, tag = 'smem constant byte address 0x4 - core index']
  #allocation1 [shape = 'u32[72,128]{1,0:T(1,128)}', space=vmem, size = 0x9000, scoped, tag = 'internal scratch']
  %s0 = inlined_call_operand.hbm [shape: f32[8,32], index: 0, kind: input, shape index: {}]
  %s1 = inlined_call_operand.hbm [shape: f32[32,128], index: 1, kind: input, shape index: {}]
  %s2 = inlined_call_operand.vmem [shape: f32[1,128], index: 2, kind: input, shape index: {}]
  %s3 = inlined_call_operand.hbm [shape: f32[8,128], index: 3, kind: output, shape index: {}]
  %s4 = sld [smem:[#allocation0]]
  $region30: #{tpu_custom_call.1} parent=0
    _
  %s6 = ssub.s32 1, %s4
  %s7 = scalar_select 0, %s6, %s4
  $region1: #{tpu_custom_call.1} parent=0
    #allocation2 [shape = 'u8[4096]{0}', space=vmem, size = 0x1000, scoped, tag = 'input window, operand 0, single buffered']
    #allocation3 [shape = 's32[1]{0}', space=sflag, size = 0x4, scoped, tag = 'scoped memory for tpu_custom_call.1']
    #allocation4 [shape = 's32[1]{0}', space=sflag, size = 0x4, scoped, tag = 'scoped memory for tpu_custom_call.1']
    #allocation5 [shape = 'u8[16384]{0}', space=vmem, size = 0x4000, scoped, tag = 'input window, operand 1, single buffered']
    #allocation6 [shape = 's32[1]{0}', space=sflag, size = 0x4, scoped, tag = 'scoped memory for tpu_custom_call.1']
    #allocation7 [shape = 'u8[4096]{0}', space=vmem, size = 0x1000, scoped, tag = 'output window, operand 0, single buffered']
    %8 = vsyncpa [#allocation3], 0
    %9 = vsyncpa [#allocation6], 0
    %10 = vsyncpa [#allocation4], 0
    // Predicated region
    $region2: #{tpu_custom_call.1} parent=1 // pred_check
      _
    $region3: #{tpu_custom_call.1} parent=1 // pred_check_branch
      %12 = sbr.rel (0) target = $region5
    $region4: #{tpu_custom_call.1} parent=1 // pred_region
      %14 = vsyncadd [#allocation3], 0
      %s16 = sshll.u32 %s0, 4
      %s17 = int_to_ptr.hbm [resolvable:$true] %s16
      %s18 = sshll.u32 [#allocation2], 4
      %s19 = int_to_ptr.vmem [resolvable:$true] %s18
      %21 = dma.hbm_to_vmem [thread:$0]  %s17, 128, %s19, [#allocation3]
    $region5: #{tpu_custom_call.1} parent=1 // pred_fallthru
      _
    // Predicated region
    $region6: #{tpu_custom_call.1} parent=1 // pred_check
      _
    $region7: #{tpu_custom_call.1} parent=1 // pred_check_branch
      %23 = sbr.rel (0) target = $region9
    $region8: #{tpu_custom_call.1} parent=1 // pred_region
      %25 = vsyncadd [#allocation6], 0
      %s26 = sshll.u32 %s1, 4
      %s27 = int_to_ptr.hbm [resolvable:$true] %s26
      %s28 = sshll.u32 [#allocation5], 4
      %s29 = int_to_ptr.vmem [resolvable:$true] %s28
      %34 = dma.hbm_to_vmem [thread:$0]  %s27, 512, %s29, [#allocation6], 128, 128, 8
    $region9: #{tpu_custom_call.1} parent=1 // pred_fallthru
      _
    // Predicated region
    $region10: #{tpu_custom_call.1} parent=1 // pred_check
      _
    $region11: #{tpu_custom_call.1} parent=1 // pred_check_branch
      %36 = sbr.rel (0) target = $region13
    $region12: #{tpu_custom_call.1} parent=1 // pred_region
      _
    $region13: #{tpu_custom_call.1} parent=1 // pred_fallthru
      _
    // Predicated region
    $region14: #{tpu_custom_call.1} parent=1 // pred_check
      _
    $region15: #{tpu_custom_call.1} parent=1 // pred_check_branch
      %38 = sbr.rel (0) target = $region17
    $region16: #{tpu_custom_call.1} parent=1 // pred_region
      %40 = dma.done [#allocation3], 128
    $region17: #{tpu_custom_call.1} parent=1 // pred_fallthru
      _
    // Predicated region
    $region18: #{tpu_custom_call.1} parent=1 // pred_check
      _
    $region19: #{tpu_custom_call.1} parent=1 // pred_check_branch
      %42 = sbr.rel (0) target = $region21
    $region20: #{tpu_custom_call.1} parent=1 // pred_region
      %44 = dma.done [#allocation6], 512
    $region21: #{tpu_custom_call.1} parent=1 // pred_fallthru
      _
    %v45 = vld [vmem:[#allocation2] sm:$0xff]
    %v46 = vld [vmem:[#allocation5] sm:$0xff]
    %v47 = vld [vmem:[#allocation5 + $0x8] sm:$0xff]
    %v48 = vld [vmem:[#allocation5 + $0x10] sm:$0xff]
    %v49 = vld [vmem:[#allocation5 + $0x18] sm:$0xff]
    %v50 = vld [vmem:[%s2] sm:$0x1]
    %v52 = vperm.slane %v50, 0
    %vm54 = vcmask 261120
    %v56 = vsel %vm54, %v45, 0
    %58 = vmatpush.msra.mxu0 0.0
    %59 = vmatpush.msra.mxu0 0.0
    %60 = vmatpush.msra.mxu0 0.0
    %61 = vmatpush.msra.mxu0 0.0
    %62 = vmatpush.msra.mxu0 0.0
    %63 = vmatpush.msra.mxu0 0.0
    %64 = vmatpush.msra.mxu0 0.0
    %65 = vmatpush.msra.mxu0 0.0
    %66 = vmatpush.msra.mxu0 0.0
    %67 = vmatpush.msra.mxu0 0.0
    %68 = vmatpush.msra.mxu0 0.0
    %69 = vmatpush.msra.mxu0 0.0
    %70 = vmatpush.msra.mxu0 %v49
    %71 = vmatpush.msra.mxu0 %v48
    %72 = vmatpush.msra.mxu0 %v47
    %73 = vmatpush.msra.mxu0 %v46
    %74 = vmatmul.f32.gmra.mxu0 %v56
    %v75 = vpop.f32.mrf.mxu0
    %v76 = vadd.f32 %v52, %v75
    %77 = vdwg.mxu0
    %78 = vmax.xlane.f32.xlu0 %v76
    %v79 = vpop.xlane.xlu0 %78
    %v80 = vsub.f32 %v76, %v79
    %v81 = vmul.f32 %v80, 1.442695
    %v82 = vpow.pop %v81
    %83 = vadd.xlane.f32.xlu0 %v82
    %v84 = vpop.xlane.xlu0 %83
    %v85 = vlog2.pop %v84
    %v86 = vmul.f32 %v85, 0.6931472
    %v87 = vsub.f32 %v80, %v86
    %88 = vst [vmem:[#allocation7] sm:$0xff] %v87
    // Predicated region
    $region22: #{tpu_custom_call.1} parent=1 // pred_check
      _
    $region23: #{tpu_custom_call.1} parent=1 // pred_check_branch
      %90 = sbr.rel (0) target = $region25
    $region24: #{tpu_custom_call.1} parent=1 // pred_region
      %92 = vsyncadd [#allocation4], 0
      %s94 = sshll.u32 [#allocation7], 4
      %s95 = int_to_ptr.vmem [resolvable:$true] %s94
      %s96 = sshll.u32 %s3, 4
      %s97 = int_to_ptr.hbm [resolvable:$true] %s96
      %99 = dma.vmem_to_hbm [thread:$0]  %s95, 128, %s97, [#allocation4]
    $region25: #{tpu_custom_call.1} parent=1 // pred_fallthru
      _
    // Predicated region
    $region26: #{tpu_custom_call.1} parent=1 // pred_check
      _
    $region27: #{tpu_custom_call.1} parent=1 // pred_check_branch
      %101 = sbr.rel (0) target = $region29
    $region28: #{tpu_custom_call.1} parent=1 // pred_region
      %103 = dma.done [#allocation4], 128
    $region29: #{tpu_custom_call.1} parent=1 // pred_fallthru
      _
    %104 = vsyncpa [#allocation3], 1
    %105 = vsyncpa [#allocation6], 1
    %106 = vsyncpa [#allocation4], 1

</llo_original>
